<compile_context>
chip_gen: v6e
topology: v6e:2x2x1
jax: 0.10.0
libtpu: 0.0.40
codegen_flags: <defaults>
</compile_context>

<pallas_src>
import jax
import jax.numpy as jnp
from jax import lax
from jax.experimental import pallas as pl
from jax.experimental.pallas import tpu as pltpu


def _round_up(x, m):
    return ((x + m - 1) // m) * m


def _vmem_limit_bytes():
    """Generation-aware scoped-VMEM cap: half of physical, clamped 32..96 MiB."""
    mib = 1024 * 1024
    try:
        cap = pltpu.get_tpu_info().vmem_capacity_bytes
        return int(max(32 * mib, min(cap // 2, 96 * mib)))
    except Exception:
        return 32 * mib


def conv_stats_kernel(p_ref, w_ref, conv_ref, stats_ref):
    """One (row-block, Cout-block) tile: fat matmul + partial BN statistics.

    p_ref:     (TR, K)     im2col patch rows, K = KH*KW*Cin (compute dtype)
    w_ref:     (K, TC)     folded weight tile, TC = Cout tile (lane-dense)
    conv_ref:  (TR, TC)    conv output staging tile (compute dtype)
    stats_ref: (1, 8, TC)  row 0 = sum, row 1 = sum of squares (f32).
                           Rows 2..7 are sublane padding and are never read.
    """
    acc = jnp.dot(p_ref[...], w_ref[...], preferred_element_type=jnp.float32)
    conv_ref[...] = acc.astype(conv_ref.dtype)
    stats_ref[0, 0:1, :] = jnp.sum(acc, axis=0, keepdims=True)
    stats_ref[0, 1:2, :] = jnp.sum(acc * acc, axis=0, keepdims=True)


def bn_relu_kernel(y_ref, scale_ref, shift_ref, o_ref):
    """y = relu(conv * scale + shift) on one (rows, Cpad) lane-dense tile."""
    y = y_ref[...].astype(jnp.float32)          # keep elementwise math in f32
    o_ref[...] = jnp.maximum(y * scale_ref[...] + shift_ref[...], 0.0
                             ).astype(o_ref.dtype)


def conv_block(x_nchw, w_oihw, gamma, beta, *, stride=2, padding=1, eps=1e-5,
               compute_dtype=jnp.bfloat16, tile_rows=512, tile_c=128):
    """NCHW in / NCHW out, matching PyTorch ConvBlock.forward (training BN).

    compute_dtype=jnp.float32 gives exact parity with the f32 reference;
    bfloat16 (default) uses the native MXU rate with f32 accumulation.
    """
    N, Cin, H, W = x_nchw.shape
    Cout, Cin_w, KH, KW = w_oihw.shape
    assert Cin == Cin_w, "groups != 1 not supported"

    Hp, Wp = H + 2 * padding, W + 2 * padding
    Ho = (Hp - KH) // stride + 1
    Wo = (Wp - KW) // stride + 1
    K = KH * KW * Cin

    R = N * Ho * Wo                              # flattened output rows
    TR = min(tile_rows, _round_up(R, 8))         # big row blocks, >=8 sublanes
    R_pad = _round_up(R, TR)
    n_rb = R_pad // TR

    Cpad = _round_up(Cout, tile_c)               # lane-dense output channels
    n_cb = Cpad // tile_c

    # ---- Layout glue (plain JAX, outside the kernels) ---------------------
    # NHWC + spatial zero-pad, then fold the KHxKW taps into the channel axis
    # (im2col).  Every in-kernel access is contiguous and the MXU contraction
    # becomes K = KH*KW*Cin instead of Cin.
    x = jnp.transpose(x_nchw, (0, 2, 3, 1)).astype(compute_dtype)
    x = jnp.pad(x, ((0, 0), (padding, padding), (padding, padding), (0, 0)))
    taps = []
    for kh in range(KH):
        for kw in range(KW):
            taps.append(x[:, kh:kh + (Ho - 1) * stride + 1:stride,
                          kw:kw + (Wo - 1) * stride + 1:stride, :])
    patches = jnp.concatenate(taps, axis=-1).reshape(R, K)
    # Zero row padding: contributes 0 to both BN sums, sliced off at the end.
    patches = jnp.pad(patches, ((0, R_pad - R), (0, 0)))

    # Weights (Cout, Cin, KH, KW) -> (KH, KW, Cin, Cout) -> (K, Cpad), same
    # tap order as the patch fold; padded output channels are all-zero.
    w = jnp.transpose(w_oihw, (2, 3, 1, 0)).reshape(K, Cout).astype(compute_dtype)
    w = jnp.pad(w, ((0, 0), (0, Cpad - Cout)))

    vmem_limit = _vmem_limit_bytes()

    # ---- Pass 1: conv-as-matmul + per-tile partial BN statistics ----------
    conv_out, stats = pl.pallas_call(
        conv_stats_kernel,
        out_shape=(
            jax.ShapeDtypeStruct((R_pad, Cpad), compute_dtype),
            jax.ShapeDtypeStruct((n_rb, 8, Cpad), jnp.float32),
        ),
        grid=(n_rb, n_cb),        # cout innermost: patch-block DMA is reused
        in_specs=[
            pl.BlockSpec((TR, K), lambda r, c: (r, 0)),
            pl.BlockSpec((K, tile_c), lambda r, c: (0, c)),
        ],
        out_specs=(
            pl.BlockSpec((TR, tile_c), lambda r, c: (r, c)),
            pl.BlockSpec((1, 8, tile_c), lambda r, c: (r, 0, c)),
        ),
        compiler_params=pltpu.CompilerParams(
            dimension_semantics=("parallel", "parallel"),
            vmem_limit_bytes=vmem_limit,
        ),
    )(patches, w)

    # ---- Tiny per-channel reduction: batch mean/var -> scale/shift --------
    cnt = jnp.float32(R)                         # true count (not R_pad)
    s1 = jnp.sum(stats[:, 0, :], axis=0)         # (Cpad,)
    s2 = jnp.sum(stats[:, 1, :], axis=0)         # (Cpad,)
    mean = s1 / cnt
    # Biased batch variance (PyTorch training BN); E[x^2]-E[x]^2 in f32 with a
    # clamp for the cancellation-prone tail.
    var = jnp.maximum(s2 / cnt - mean * mean, 0.0)
    inv = lax.rsqrt(var + eps)
    gamma_p = jnp.pad(gamma.astype(jnp.float32), (0, Cpad - Cout))
    beta_p = jnp.pad(beta.astype(jnp.float32), (0, Cpad - Cout))
    scale = (gamma_p * inv).reshape(1, Cpad)
    shift = (beta_p - mean * gamma_p * inv).reshape(1, Cpad)

    # ---- Pass 2: normalize + affine + ReLU (HBM-bandwidth bound) ----------
    out_flat = pl.pallas_call(
        bn_relu_kernel,
        out_shape=jax.ShapeDtypeStruct((R_pad, Cpad), x_nchw.dtype),
        grid=(n_rb,),
        in_specs=[
            pl.BlockSpec((TR, Cpad), lambda r: (r, 0)),
            pl.BlockSpec((1, Cpad), lambda r: (0, 0)),   # resident, DMA'd once
            pl.BlockSpec((1, Cpad), lambda r: (0, 0)),
        ],
        out_specs=pl.BlockSpec((TR, Cpad), lambda r: (r, 0)),
        compiler_params=pltpu.CompilerParams(
            dimension_semantics=("parallel",),
            vmem_limit_bytes=vmem_limit,
        ),
    )(conv_out, scale, shift)

    # Slice off padding, restore NHWC -> NCHW (PyTorch convention).
    out = out_flat[:R, :Cout].reshape(N, Ho, Wo, Cout)
    return jnp.transpose(out, (0, 3, 1, 2))


def conv_block_reference(x, w, gamma, beta, *, stride=2, padding=1, eps=1e-5):
    """Pure-JAX reference (lax.conv) for correctness checking."""
    y = lax.conv_general_dilated(
        x.astype(jnp.float32), w.astype(jnp.float32),
        window_strides=(stride, stride),
        padding=((padding, padding), (padding, padding)),
        dimension_numbers=("NCHW", "OIHW", "NCHW"),
    )
    mean = y.mean(axis=(0, 2, 3), keepdims=True)
    var = ((y - mean) ** 2).mean(axis=(0, 2, 3), keepdims=True)
    y = (y - mean) * lax.rsqrt(var + eps)
    y = y * gamma.reshape(1, -1, 1, 1) + beta.reshape(1, -1, 1, 1)
    return jnp.maximum(y, 0.0)


if __name__ == "__main__":
    key = jax.random.PRNGKey(0)
    k_x, k_w, k_g, k_b = jax.random.split(key, 4)

    # Small shapes consistent with ConvBlock: NCHW input, 3x3 conv, stride 2.
    N, Cin, H, W = 2, 4, 16, 16
    Cout, KH, KW = 8, 3, 3

    x = jax.random.normal(k_x, (N, Cin, H, W), dtype=jnp.float32)

    # Deterministic "kaiming_normal_" style init: std = sqrt(2 / fan_in).
    fan_in = Cin * KH * KW
    w = jax.random.normal(k_w, (Cout, Cin, KH, KW), dtype=jnp.float32) * jnp.sqrt(
        2.0 / fan_in)

    # BatchNorm2d default init is weight=1 / bias=0; use non-trivial values so
    # the affine path is actually exercised by the check.
    gamma = 1.0 + 0.2 * jax.random.normal(k_g, (Cout,), dtype=jnp.float32)
    beta = 0.2 * jax.random.normal(k_b, (Cout,), dtype=jnp.float32)

    ref = jax.block_until_ready(
        conv_block_reference(x, w, gamma, beta, stride=2, padding=1, eps=1e-5))

    # Exact-parity path (f32 matmul / f32 staging).
    out_f32 = jax.block_until_ready(
        conv_block(x, w, gamma, beta, stride=2, padding=1, eps=1e-5,
                   compute_dtype=jnp.float32))
    assert out_f32.shape == (N, Cout, H // 2, W // 2), out_f32.shape
    assert jnp.allclose(out_f32, ref, atol=1e-4, rtol=1e-4), (
        float(jnp.max(jnp.abs(out_f32 - ref))))

    # Default fast path (bf16 MXU inputs + bf16 staging, f32 accumulation).
    # Loose tolerance: bf16 input/staging rounding; algorithmic parity is
    # already verified by the f32 path above.
    out_bf16 = jax.block_until_ready(
        conv_block(x, w, gamma, beta, stride=2, padding=1, eps=1e-5))
    assert out_bf16.shape == (N, Cout, H // 2, W // 2), out_bf16.shape
    assert jnp.allclose(out_bf16, ref, atol=1e-1, rtol=1e-1), (
        float(jnp.max(jnp.abs(out_bf16 - ref))))

    print("KERNEL_OK")
</pallas_src>

<mosaic_0001>
module attributes {stable_mosaic.version = 11 : i64} {
  func.func @conv_stats_kernel(%arg0: i32, %arg1: i32, %arg2: memref<128x36xf32, #tpu.memory_space<vmem>>, %arg3: memref<36x128xf32, #tpu.memory_space<vmem>>, %arg4: memref<128x128xf32, #tpu.memory_space<vmem>>, %arg5: memref<1x8x128xf32, #tpu.memory_space<vmem>>) attributes {dimension_semantics = [#tpu.dimension_semantics<parallel>, #tpu.dimension_semantics<parallel>], iteration_bounds = array<i64: 1, 1>, scalar_prefetch = 0 : i64, scratch_operands = 0 : i64, tpu.core_type = #tpu.core_type<tc>, window_params = [{transform_indices = @transform_0, window_bounds = array<i64: 128, 36>}, {transform_indices = @transform_1, window_bounds = array<i64: 36, 128>}, {transform_indices = @transform_2, window_bounds = array<i64: 128, 128>}, {transform_indices = @transform_3, window_bounds = array<i64: 1, 8, 128>}]} {
    %c0 = arith.constant 0 : index
    %c0_0 = arith.constant 0 : index
    %0 = vector.load %arg2[%c0, %c0_0] : memref<128x36xf32, #tpu.memory_space<vmem>>, vector<128x36xf32>
    %c0_1 = arith.constant 0 : index
    %c0_2 = arith.constant 0 : index
    %1 = vector.load %arg3[%c0_1, %c0_2] : memref<36x128xf32, #tpu.memory_space<vmem>>, vector<36x128xf32>
    %cst = arith.constant dense<0.000000e+00> : vector<128x128xf32>
    %2 = tpu.matmul %0, %1, %cst {dimension_numbers = #tpu.dot_dimension_numbers<[1], [0], [0], [1], [0, 0, 1, 1], [], []>} : vector<128x36xf32>, vector<36x128xf32>, vector<128x128xf32> -> vector<128x128xf32>
    %c0_3 = arith.constant 0 : index
    %c0_4 = arith.constant 0 : index
    %3 = vector.load %arg4[%c0_3, %c0_4] : memref<128x128xf32, #tpu.memory_space<vmem>>, vector<128x128xf32>
    tpu.vector_store %arg4[%c0_3, %c0_4], %2 {strides = array<i32>} : memref<128x128xf32, #tpu.memory_space<vmem>>, vector<128x128xf32>,
    %cst_5 = arith.constant dense<0.000000e+00> : vector<128xf32>
    %4 = vector.multi_reduction <add>, %2, %cst_5 [0] : vector<128x128xf32> to vector<128xf32>
    %5 = vector.shape_cast %4 : vector<128xf32> to vector<1x128xf32>
    %c0_6 = arith.constant 0 : index
    %c0_7 = arith.constant 0 : index
    %c0_8 = arith.constant 0 : index
    %6 = vector.load %arg5[%c0_6, %c0_7, %c0_8] : memref<1x8x128xf32, #tpu.memory_space<vmem>>, vector<1x1x128xf32>
    %7 = vector.shape_cast %6 : vector<1x1x128xf32> to vector<1x128xf32>
    %8 = vector.shape_cast %5 : vector<1x128xf32> to vector<1x1x128xf32>
    tpu.vector_store %arg5[%c0_6, %c0_7, %c0_8], %8 {strides = array<i32>} : memref<1x8x128xf32, #tpu.memory_space<vmem>>, vector<1x1x128xf32>,
    %9 = arith.mulf %2, %2 : vector<128x128xf32>
    %cst_9 = arith.constant dense<0.000000e+00> : vector<128xf32>
    %10 = vector.multi_reduction <add>, %9, %cst_9 [0] : vector<128x128xf32> to vector<128xf32>
    %11 = vector.shape_cast %10 : vector<128xf32> to vector<1x128xf32>
    %c0_10 = arith.constant 0 : index
    %c1 = arith.constant 1 : index
    %c0_11 = arith.constant 0 : index
    %12 = vector.load %arg5[%c0_10, %c1, %c0_11] : memref<1x8x128xf32, #tpu.memory_space<vmem>>, vector<1x1x128xf32>
    %13 = vector.shape_cast %12 : vector<1x1x128xf32> to vector<1x128xf32>
    %14 = vector.shape_cast %11 : vector<1x128xf32> to vector<1x1x128xf32>
    tpu.vector_store %arg5[%c0_10, %c1, %c0_11], %14 {strides = array<i32>} : memref<1x8x128xf32, #tpu.memory_space<vmem>>, vector<1x1x128xf32>,
    return
  }
  func.func @transform_0(%arg0: i32, %arg1: i32) -> (i32, i32) {
    %c0_i32 = arith.constant 0 : i32
    %c0_i32_0 = arith.constant 0 : i32
    return %arg0, %c0_i32 : i32, i32
  }
  func.func @transform_1(%arg0: i32, %arg1: i32) -> (i32, i32) {
    %c0_i32 = arith.constant 0 : i32
    %c0_i32_0 = arith.constant 0 : i32
    return %c0_i32, %arg1 : i32, i32
  }
  func.func @transform_2(%arg0: i32, %arg1: i32) -> (i32, i32) {
    %c0_i32 = arith.constant 0 : i32
    return %arg0, %arg1 : i32, i32
  }
  func.func @transform_3(%arg0: i32, %arg1: i32) -> (i32, i32, i32) {
    %c0_i32 = arith.constant 0 : i32
    %c0_i32_0 = arith.constant 0 : i32
    return %arg0, %c0_i32, %arg1 : i32, i32, i32
  }
}

</mosaic_0001>

<llo_original>
// kernel: tpu_custom_call.1
$region0: #{tpu_custom_call.1}
  #allocation0 [shape = 'u32[]', space=smem, size = 0x4, offset = 0x4, fixed_abs, tag = 'smem constant byte address 0x4 - core index']
  #allocation1 [shape = 'u32[144,128]{1,0:T(1,128)}', space=vmem, size = 0x12000, scoped, tag = 'internal scratch']
  %s0 = inlined_call_operand.vmem [shape: f32[128,36], index: 0, kind: input, shape index: {}]
  %s1 = inlined_call_operand.vmem [shape: f32[36,128], index: 1, kind: input, shape index: {}]
  %s2 = inlined_call_operand.hbm [shape: f32[128,128], index: 2, kind: output, shape index: {0}]
  %s3 = inlined_call_operand.hbm [shape: f32[1,8,128], index: 3, kind: output, shape index: {1}]
  %4 = xla_tuple %s2, %s3
  %s5 = sld [smem:[#allocation0]]
  $region26: #{tpu_custom_call.1} parent=0
    _
  %s7 = ssub.s32 1, %s5
  %s8 = scalar_select 0, %s7, %s5
  $region1: #{tpu_custom_call.1} parent=0
    #allocation2 [shape = 'u8[65536]{0}', space=vmem, size = 0x10000, scoped, tag = 'output window, operand 0, single buffered']
    #allocation3 [shape = 's32[1]{0}', space=sflag, size = 0x4, scoped, tag = 'scoped memory for tpu_custom_call.1']
    #allocation4 [shape = 'u8[4096]{0}', space=vmem, size = 0x1000, scoped, tag = 'output window, operand 1, single buffered']
    #allocation5 [shape = 's32[1]{0}', space=sflag, size = 0x4, scoped, tag = 'scoped memory for tpu_custom_call.1']
    %9 = vsyncpa [#allocation3], 0
    %10 = vsyncpa [#allocation5], 0
    // Predicated region
    $region2: #{tpu_custom_call.1} parent=1 // pred_check
      _
    $region3: #{tpu_custom_call.1} parent=1 // pred_check_branch
      %12 = sbr.rel (0) target = $region5
    $region4: #{tpu_custom_call.1} parent=1 // pred_region
      _
    $region5: #{tpu_custom_call.1} parent=1 // pred_fallthru
      _
    // Predicated region
    $region6: #{tpu_custom_call.1} parent=1 // pred_check
      _
    $region7: #{tpu_custom_call.1} parent=1 // pred_check_branch
      %14 = sbr.rel (0) target = $region9
    $region8: #{tpu_custom_call.1} parent=1 // pred_region
      _
    $region9: #{tpu_custom_call.1} parent=1 // pred_fallthru
      _
    %v15 = vld [vmem:[%s0] sm:$0xff]
    %v16 = vld [vmem:[%s0 + $0x8] sm:$0xff]
    %v17 = vld [vmem:[%s0 + $0x10] sm:$0xff]
    %v18 = vld [vmem:[%s0 + $0x18] sm:$0xff]
    %v19 = vld [vmem:[%s0 + $0x20] sm:$0xff]
    %v20 = vld [vmem:[%s0 + $0x28] sm:$0xff]
    %v21 = vld [vmem:[%s0 + $0x30] sm:$0xff]
    %v22 = vld [vmem:[%s0 + $0x38] sm:$0xff]
    %v23 = vld [vmem:[%s0 + $0x40] sm:$0xff]
    %v24 = vld [vmem:[%s0 + $0x48] sm:$0xff]
    %v25 = vld [vmem:[%s0 + $0x50] sm:$0xff]
    %v26 = vld [vmem:[%s0 + $0x58] sm:$0xff]
    %v27 = vld [vmem:[%s0 + $0x60] sm:$0xff]
    %v28 = vld [vmem:[%s0 + $0x68] sm:$0xff]
    %v29 = vld [vmem:[%s0 + $0x70] sm:$0xff]
    %v30 = vld [vmem:[%s0 + $0x78] sm:$0xff]
    %v31 = vld [vmem:[%s1] sm:$0xff]
    %v32 = vld [vmem:[%s1 + $0x8] sm:$0xff]
    %v33 = vld [vmem:[%s1 + $0x10] sm:$0xff]
    %v34 = vld [vmem:[%s1 + $0x18] sm:$0xff]
    %v35 = vld [vmem:[%s1 + $0x20] sm:$0xf]
    %vm36 = vcmask 293888
    %v38 = vsel %vm36, %v15, 0
    %v41 = vsel %vm36, %v16, 0
    %v44 = vsel %vm36, %v17, 0
    %v47 = vsel %vm36, %v18, 0
    %v50 = vsel %vm36, %v19, 0
    %v53 = vsel %vm36, %v20, 0
    %v56 = vsel %vm36, %v21, 0
    %v59 = vsel %vm36, %v22, 0
    %v62 = vsel %vm36, %v23, 0
    %v65 = vsel %vm36, %v24, 0
    %v68 = vsel %vm36, %v25, 0
    %v71 = vsel %vm36, %v26, 0
    %v74 = vsel %vm36, %v27, 0
    %v77 = vsel %vm36, %v28, 0
    %v80 = vsel %vm36, %v29, 0
    %v83 = vsel %vm36, %v30, 0
    %vm85 = vcmask 1043456
    %v87 = vsel %vm85, %v35, 0
    %89 = vmatprep.subr.mxu0 0.0
    %90 = vmatpush1.msra.mxu0 0.0
    %91 = vmatprep.subr.mxu0 0.0
    %92 = vmatpush1.msra.mxu0 0.0
    %93 = vmatprep.subr.mxu0 0.0
    %94 = vmatpush1.msra.mxu0 0.0
    %95 = vmatprep.subr.mxu0 0.0
    %96 = vmatpush1.msra.mxu0 0.0
    %97 = vmatprep.subr.mxu0 0.0
    %98 = vmatpush1.msra.mxu0 0.0
    %99 = vmatprep.subr.mxu0 0.0
    %100 = vmatpush1.msra.mxu0 0.0
    %101 = vmatprep.subr.mxu0 0.0
    %102 = vmatpush1.msra.mxu0 0.0
    %103 = vmatprep.subr.mxu0 0.0
    %104 = vmatpush1.msra.mxu0 0.0
    %105 = vmatprep.subr.mxu0 0.0
    %106 = vmatpush1.msra.mxu0 0.0
    %107 = vmatprep.subr.mxu0 0.0
    %108 = vmatpush1.msra.mxu0 0.0
    %109 = vmatprep.subr.mxu0 0.0
    %110 = vmatpush1.msra.mxu0 0.0
    %111 = vmatprep.subr.mxu0 0.0
    %112 = vmatpush1.msra.mxu0 %v87
    %113 = vmatprep.subr.mxu0 0.0
    %114 = vmatpush1.msra.mxu0 %v34
    %115 = vmatprep.subr.mxu0 0.0
    %116 = vmatpush1.msra.mxu0 %v33
    %117 = vmatprep.subr.mxu0 0.0
    %118 = vmatpush1.msra.mxu0 %v32
    %119 = vmatprep.subr.mxu0 0.0
    %120 = vmatpush1.msra.mxu0 %v31
    %121 = vmatprep.subr.mxu0 0.0
    %122 = vmatpush2.msra.mxu0 0.0
    %123 = vmatprep.subr.mxu0 0.0
    %124 = vmatpush2.msra.mxu0 0.0
    %125 = vmatprep.subr.mxu0 0.0
    %126 = vmatpush2.msra.mxu0 0.0
    %127 = vmatprep.subr.mxu0 0.0
    %128 = vmatpush2.msra.mxu0 0.0
    %129 = vmatprep.subr.mxu0 0.0
    %130 = vmatpush2.msra.mxu0 0.0
    %131 = vmatprep.subr.mxu0 0.0
    %132 = vmatpush2.msra.mxu0 0.0
    %133 = vmatprep.subr.mxu0 0.0
    %134 = vmatpush2.msra.mxu0 0.0
    %135 = vmatprep.subr.mxu0 0.0
    %136 = vmatpush2.msra.mxu0 0.0
    %137 = vmatprep.subr.mxu0 0.0
    %138 = vmatpush2.msra.mxu0 0.0
    %139 = vmatprep.subr.mxu0 0.0
    %140 = vmatpush2.msra.mxu0 0.0
    %141 = vmatprep.subr.mxu0 0.0
    %142 = vmatpush2.msra.mxu0 0.0
    %143 = vmatprep.subr.mxu0 0.0
    %144 = vmatpush2.msra.mxu0 0.0
    %145 = vmatprep.subr.mxu0 0.0
    %146 = vmatpush2.msra.mxu0 0.0
    %147 = vmatprep.subr.mxu0 0.0
    %148 = vmatpush2.msra.mxu0 0.0
    %149 = vmatprep.subr.mxu0 0.0
    %150 = vmatpush2.msra.mxu0 0.0
    %151 = vmatprep.subr.mxu0 0.0
    %152 = vmatpush2.msra.mxu0 0.0
    %153 = vmatprep.mubr.f32.mxu0 0.0
    %154 = vmatmul.mubr.f32.gmra.mxu0 %v38
    %v155 = vpop.f32.mrf.mxu0
    %v156 = vadd.f32 0.0, %v155
    %v157 = vpop.f32.mrf.mxu0
    %158 = vmatprep.mubr.f32.mxu0 0.0
    %159 = vmatmul.mubr.f32.gmra.mxu0 %v41
    %v160 = vpop.f32.mrf.mxu0
    %v161 = vadd.f32 0.0, %v160
    %v162 = vpop.f32.mrf.mxu0
    %163 = vmatprep.mubr.f32.mxu0 0.0
    %164 = vmatmul.mubr.f32.gmra.mxu0 %v44
    %v165 = vpop.f32.mrf.mxu0
    %v166 = vadd.f32 0.0, %v165
    %v167 = vpop.f32.mrf.mxu0
    %168 = vmatprep.mubr.f32.mxu0 0.0
    %169 = vmatmul.mubr.f32.gmra.mxu0 %v47
    %v170 = vpop.f32.mrf.mxu0
    %v171 = vadd.f32 0.0, %v170
    %v172 = vpop.f32.mrf.mxu0
    %173 = vmatprep.mubr.f32.mxu0 0.0
    %174 = vmatmul.mubr.f32.gmra.mxu0 %v50
    %v175 = vpop.f32.mrf.mxu0
    %v176 = vadd.f32 0.0, %v175
    %v177 = vpop.f32.mrf.mxu0
    %178 = vmatprep.mubr.f32.mxu0 0.0
    %179 = vmatmul.mubr.f32.gmra.mxu0 %v53
    %v180 = vpop.f32.mrf.mxu0
    %v181 = vadd.f32 0.0, %v180
    %v182 = vpop.f32.mrf.mxu0
    %183 = vmatprep.mubr.f32.mxu0 0.0
    %184 = vmatmul.mubr.f32.gmra.mxu0 %v56
    %v185 = vpop.f32.mrf.mxu0
    %v186 = vadd.f32 0.0, %v185
    %v187 = vpop.f32.mrf.mxu0
    %188 = vmatprep.mubr.f32.mxu0 0.0
    %189 = vmatmul.mubr.f32.gmra.mxu0 %v59
    %v190 = vpop.f32.mrf.mxu0
    %v191 = vadd.f32 0.0, %v190
    %v192 = vpop.f32.mrf.mxu0
    %193 = vmatprep.mubr.f32.mxu0 0.0
    %194 = vmatmul.mubr.f32.gmra.mxu0 %v62
    %v195 = vpop.f32.mrf.mxu0
    %v196 = vadd.f32 0.0, %v195
    %v197 = vpop.f32.mrf.mxu0
    %198 = vmatprep.mubr.f32.mxu0 0.0
    %199 = vmatmul.mubr.f32.gmra.mxu0 %v65
    %v200 = vpop.f32.mrf.mxu0
    %v201 = vadd.f32 0.0, %v200
    %v202 = vpop.f32.mrf.mxu0
    %203 = vmatprep.mubr.f32.mxu0 0.0
    %204 = vmatmul.mubr.f32.gmra.mxu0 %v68
    %v205 = vpop.f32.mrf.mxu0
    %v206 = vadd.f32 0.0, %v205
    %v207 = vpop.f32.mrf.mxu0
    %208 = vmatprep.mubr.f32.mxu0 0.0
    %209 = vmatmul.mubr.f32.gmra.mxu0 %v71
    %v210 = vpop.f32.mrf.mxu0
    %v211 = vadd.f32 0.0, %v210
    %v212 = vpop.f32.mrf.mxu0
    %213 = vmatprep.mubr.f32.mxu0 0.0
    %214 = vmatmul.mubr.f32.gmra.mxu0 %v74
    %v215 = vpop.f32.mrf.mxu0
    %v216 = vadd.f32 0.0, %v215
    %v217 = vpop.f32.mrf.mxu0
    %218 = vmatprep.mubr.f32.mxu0 0.0
    %219 = vmatmul.mubr.f32.gmra.mxu0 %v77
    %v220 = vpop.f32.mrf.mxu0
    %v221 = vadd.f32 0.0, %v220
    %v222 = vpop.f32.mrf.mxu0
    %223 = vmatprep.mubr.f32.mxu0 0.0
    %224 = vmatmul.mubr.f32.gmra.mxu0 %v80
    %v225 = vpop.f32.mrf.mxu0
    %v226 = vadd.f32 0.0, %v225
    %v227 = vpop.f32.mrf.mxu0
    %228 = vmatprep.mubr.f32.mxu0 0.0
    %229 = vmatmul.mubr.f32.gmra.mxu0 %v83
    %v230 = vpop.f32.mrf.mxu0
    %v231 = vadd.f32 0.0, %v230
    %v232 = vpop.f32.mrf.mxu0
    %233 = vdwg.mxu0
    %234 = vst [vmem:[#allocation2] sm:$0xff] %v156
    %235 = vst [vmem:[#allocation2 + $0x8] sm:$0xff] %v161
    %236 = vst [vmem:[#allocation2 + $0x10] sm:$0xff] %v166
    %237 = vst [vmem:[#allocation2 + $0x18] sm:$0xff] %v171
    %238 = vst [vmem:[#allocation2 + $0x20] sm:$0xff] %v176
    %239 = vst [vmem:[#allocation2 + $0x28] sm:$0xff] %v181
    %240 = vst [vmem:[#allocation2 + $0x30] sm:$0xff] %v186
    %241 = vst [vmem:[#allocation2 + $0x38] sm:$0xff] %v191
    %242 = vst [vmem:[#allocation2 + $0x40] sm:$0xff] %v196
    %243 = vst [vmem:[#allocation2 + $0x48] sm:$0xff] %v201
    %244 = vst [vmem:[#allocation2 + $0x50] sm:$0xff] %v206
    %245 = vst [vmem:[#allocation2 + $0x58] sm:$0xff] %v211
    %246 = vst [vmem:[#allocation2 + $0x60] sm:$0xff] %v216
    %247 = vst [vmem:[#allocation2 + $0x68] sm:$0xff] %v221
    %248 = vst [vmem:[#allocation2 + $0x70] sm:$0xff] %v226
    %249 = vst [vmem:[#allocation2 + $0x78] sm:$0xff] %v231
    %v250 = vadd.f32 %v156, %v161
    %v251 = vadd.f32 %v250, %v166
    %v252 = vadd.f32 %v251, %v171
    %v253 = vadd.f32 %v252, %v176
    %v254 = vadd.f32 %v253, %v181
    %v255 = vadd.f32 %v254, %v186
    %v256 = vadd.f32 %v255, %v191
    %v257 = vadd.f32 %v256, %v196
    %v258 = vadd.f32 %v257, %v201
    %v259 = vadd.f32 %v258, %v206
    %v260 = vadd.f32 %v259, %v211
    %v261 = vadd.f32 %v260, %v216
    %v262 = vadd.f32 %v261, %v221
    %v263 = vadd.f32 %v262, %v226
    %v264 = vadd.f32 %v263, %v231
    %v265 = vrot.slane %v264, 4
    %v266 = vadd.f32 %v264, %v265
    %v267 = vrot.slane %v266, 2
    %v268 = vadd.f32 %v266, %v267
    %v269 = vrot.slane %v268, 1
    %v270 = vadd.f32 %v268, %v269
    %271 = vst [vmem:[#allocation4] sm:$0x1] %v270
    %v272 = vmul.f32 %v156, %v156
    %v273 = vmul.f32 %v161, %v161
    %v274 = vmul.f32 %v166, %v166
    %v275 = vmul.f32 %v171, %v171
    %v276 = vmul.f32 %v176, %v176
    %v277 = vmul.f32 %v181, %v181
    %v278 = vmul.f32 %v186, %v186
    %v279 = vmul.f32 %v191, %v191
    %v280 = vmul.f32 %v196, %v196
    %v281 = vmul.f32 %v201, %v201
    %v282 = vmul.f32 %v206, %v206
    %v283 = vmul.f32 %v211, %v211
    %v284 = vmul.f32 %v216, %v216
    %v285 = vmul.f32 %v221, %v221
    %v286 = vmul.f32 %v226, %v226
    %v287 = vmul.f32 %v231, %v231
    %v288 = vadd.f32 %v272, %v273
    %v289 = vadd.f32 %v288, %v274
    %v290 = vadd.f32 %v289, %v275
    %v291 = vadd.f32 %v290, %v276
    %v292 = vadd.f32 %v291, %v277
    %v293 = vadd.f32 %v292, %v278
    %v294 = vadd.f32 %v293, %v279
    %v295 = vadd.f32 %v294, %v280
    %v296 = vadd.f32 %v295, %v281
    %v297 = vadd.f32 %v296, %v282
    %v298 = vadd.f32 %v297, %v283
    %v299 = vadd.f32 %v298, %v284
    %v300 = vadd.f32 %v299, %v285
    %v301 = vadd.f32 %v300, %v286
    %v302 = vadd.f32 %v301, %v287
    %v303 = vrot.slane %v302, 4
    %v304 = vadd.f32 %v302, %v303
    %v305 = vrot.slane %v304, 2
    %v306 = vadd.f32 %v304, %v305
    %v307 = vrot.slane %v306, 1
    %v308 = vadd.f32 %v306, %v307
    %309 = vst [vmem:[#allocation4 + $0x1] sm:$0x1] %v308
    // Predicated region
    $region10: #{tpu_custom_call.1} parent=1 // pred_check
      _
    $region11: #{tpu_custom_call.1} parent=1 // pred_check_branch
      %311 = sbr.rel (0) target = $region13
    $region12: #{tpu_custom_call.1} parent=1 // pred_region
      %s313 = ssub.s32 2048, 2048
      %314 = vsyncadd [#allocation3], %s313
      %s315 = sshll.u32 [#allocation2], 4
      %s316 = int_to_ptr.vmem [resolvable:$true] %s315
      %321 = dma.vmem_to_hbm [thread:$0]  %s316, 2048, %s2, [#allocation3], 128, 128, 8
    $region13: #{tpu_custom_call.1} parent=1 // pred_fallthru
      _
    // Predicated region
    $region14: #{tpu_custom_call.1} parent=1 // pred_check
      _
    $region15: #{tpu_custom_call.1} parent=1 // pred_check_branch
      %323 = sbr.rel (0) target = $region17
    $region16: #{tpu_custom_call.1} parent=1 // pred_region
      %s325 = ssub.s32 128, 128
      %326 = vsyncadd [#allocation5], %s325
      %s328 = sshll.u32 [#allocation4], 4
      %s329 = int_to_ptr.vmem [resolvable:$true] %s328
      %331 = dma.vmem_to_hbm [thread:$0]  %s329, 128, %s3, [#allocation5]
    $region17: #{tpu_custom_call.1} parent=1 // pred_fallthru
      _
    // Predicated region
    $region18: #{tpu_custom_call.1} parent=1 // pred_check
      _
    $region19: #{tpu_custom_call.1} parent=1 // pred_check_branch
      %333 = sbr.rel (0) target = $region21
    $region20: #{tpu_custom_call.1} parent=1 // pred_region
      %334 = dma.done [#allocation3], 2048
    $region21: #{tpu_custom_call.1} parent=1 // pred_fallthru
      _
    // Predicated region
    $region22: #{tpu_custom_call.1} parent=1 // pred_check
      _
    $region23: #{tpu_custom_call.1} parent=1 // pred_check_branch
      %336 = sbr.rel (0) target = $region25
    $region24: #{tpu_custom_call.1} parent=1 // pred_region
      %337 = dma.done [#allocation5], 128
    $region25: #{tpu_custom_call.1} parent=1 // pred_fallthru
      _
    %338 = vsyncpa [#allocation3], 1
    %339 = vsyncpa [#allocation5], 1

</llo_original>
